<compile_context>
chip_gen: v7x
topology: tpu7x:2x2x1
jax: 0.10.0
libtpu: 0.0.40
codegen_flags: <defaults>
</compile_context>

<pallas_src>
import functools

import jax
import jax.numpy as jnp
from jax.experimental import pallas as pl
from jax.experimental.pallas import tpu as pltpu


def _round_up(v, m):
    return -(-v // m) * m


def _round_down(v, m):
    return (v // m) * m


def _cdiv(a, b):
    return -(-a // b)


def _patch_embed_kernel(x_ref, w_ref, b_ref, o_ref, *, n_chans, cast_dtype):
    # x_ref: (C, TN, P)   activation patches for one (b, n-tile)
    # w_ref: (C, P, TE)   weights (resident / per e-tile)
    # b_ref: (1, TE)      bias (f32)
    # o_ref: (TN, TE)     output tile
    def xs(c):
        xc = x_ref[c]
        return xc.astype(cast_dtype) if cast_dtype is not None else xc

    acc = jnp.dot(xs(0), w_ref[0], preferred_element_type=jnp.float32)
    for c in range(1, n_chans):  # static unroll; C is tiny (3-4) for patch embeds
        acc = acc + jnp.dot(xs(c), w_ref[c], preferred_element_type=jnp.float32)

    o_ref[...] = (acc + b_ref[...]).astype(o_ref.dtype)


def patch_embed(x, weight, bias, patch_size, *, out_dtype=None, compute_dtype=None,
                tile_n=512, tile_e=None, vmem_budget_bytes=None,
                vmem_limit_bytes=None):
    """x: (B, C, L); weight: (E, C, P); bias: (E,). Returns (B, N, E)."""
    B, C, L = x.shape
    E, Cw, P = weight.shape
    assert Cw == C and P == patch_size and L % P == 0
    N = L // P

    if out_dtype is None:
        out_dtype = x.dtype

    # MXU operand dtype.  The activation is NOT cast in the wrapper (that would
    # add a full extra XLA pass over x); only the tiny weight is pre-cast and
    # the x tile is cast in-kernel if needed.
    w_dtype = compute_dtype if compute_dtype is not None else x.dtype
    cast_dtype = None
    if compute_dtype is not None and jnp.dtype(compute_dtype) != jnp.dtype(x.dtype):
        cast_dtype = jnp.dtype(compute_dtype)

    # ---- layout glue: free activation reshape, tiny parameter transforms ----
    x4 = x.reshape(B, C, N, P)                                    # (B, C, N, P)
    w3 = jnp.transpose(weight, (1, 2, 0)).astype(w_dtype)         # (C, P, E)
    b_row = bias.reshape(1, E).astype(jnp.float32)

    # Lane-dense output: pad E to a multiple of 128 (sliced back after).
    E_pad = _round_up(E, 128)
    if E_pad != E:
        w3 = jnp.pad(w3, ((0, 0), (0, 0), (0, E_pad - E)))
        b_row = jnp.pad(b_row, ((0, 0), (0, E_pad - E)))

    # ---- VMEM limit / budget (conservative: safe on v7x's 64 MiB per TC) ----
    if vmem_limit_bytes is None or vmem_budget_bytes is None:
        phys = 64 * 1024 * 1024                       # worst case (v7x)
        try:
            phys = int(pltpu.get_tpu_info().vmem_capacity_bytes)
        except Exception:
            pass
        lim = min(phys // 2, 64 * 1024 * 1024)        # 32 MiB v7x, 64 MiB v5e/v6e
        if vmem_limit_bytes is None:
            vmem_limit_bytes = lim
        if vmem_budget_bytes is None:
            vmem_budget_bytes = (3 * lim) // 8        # 12 MiB v7x, 24 MiB v5e/v6e

    # ---- dtype-aware VMEM estimate and (TN, TE) selection ----
    in_itm = jnp.dtype(x.dtype).itemsize
    w_itm = jnp.dtype(w_dtype).itemsize
    out_itm = jnp.dtype(out_dtype).itemsize
    sub = {4: 8, 2: 16, 1: 32}
    P_lane = _round_up(P, 128)

    def vmem_bytes(tn, te):
        x_blk = C * _round_up(tn, sub.get(in_itm, 8)) * P_lane * in_itm
        w_blk = C * _round_up(P, sub.get(w_itm, 8)) * te * w_itm
        b_blk = 8 * te * 4
        o_blk = _round_up(tn, sub.get(out_itm, 8)) * te * out_itm
        return 2 * (x_blk + o_blk) + 2 * (w_blk + b_blk)   # 2x = double buffering

    TN = N if N <= tile_n else max(8, _round_down(tile_n, 8))
    TE = E_pad if tile_e is None else max(128, _round_up(min(tile_e, E_pad), 128))

    # Shrink TN first, but never below ~256 (HBM roofline drops fast below that);
    # past that floor, tile E instead.
    min_tn = min(TN, 256)
    while vmem_bytes(TN, TE) > vmem_budget_bytes:
        if TN > min_tn:
            TN = max(min_tn, _round_down(TN // 2, 8))
        elif TE > 128:
            TE = max(128, _round_down(TE // 2, 128))
        else:
            break

    # v7x megacore: make sure the parallel axes produce >= 2 blocks when possible
    # so both TensorCores get work.
    if B * _cdiv(N, TN) * _cdiv(E_pad, TE) < 2:
        half = _round_down(max(N // 2, 1), 8)
        if half >= 8:
            TN = min(TN, half)

    grid = (B, _cdiv(N, TN), _cdiv(E_pad, TE))

    kernel = functools.partial(_patch_embed_kernel, n_chans=C, cast_dtype=cast_dtype)

    out = pl.pallas_call(
        kernel,
        out_shape=jax.ShapeDtypeStruct((B, N, E_pad), out_dtype),
        grid=grid,
        in_specs=[
            # x4: (B, C, N, P) -> kernel block (C, TN, P); read once per (b, n)
            pl.BlockSpec((None, C, TN, P), lambda b, n, e: (b, 0, n, 0)),
            # w3: (C, P, E_pad) -> kernel block (C, P, TE); resident across (b, n)
            pl.BlockSpec((C, P, TE), lambda b, n, e: (0, 0, e)),
            # bias: (1, E_pad) -> (1, TE)
            pl.BlockSpec((1, TE), lambda b, n, e: (0, e)),
        ],
        out_specs=pl.BlockSpec((None, TN, TE), lambda b, n, e: (b, n, e)),
        compiler_params=pltpu.CompilerParams(
            dimension_semantics=("parallel", "parallel", "parallel"),
            vmem_limit_bytes=vmem_limit_bytes,
        ),
    )(x4, w3, b_row)

    if E_pad != E:
        out = out[:, :, :E]
    return out


def _reference(x, weight, bias, patch_size):
    B, C, L = x.shape
    E = weight.shape[0]
    N = L // patch_size
    x_p = x.reshape(B, C, N, patch_size).transpose(0, 2, 1, 3).reshape(B, N, C * patch_size)
    return x_p @ weight.reshape(E, -1).T + bias


if __name__ == "__main__":
    key = jax.random.PRNGKey(0)

    # ---- Test 1: small shapes matching the module (E < 128 -> padded lanes) ----
    B, C_IN, L, PATCH_SIZE, EMBED_DIM = 2, 4, 16, 4, 32
    kx, kw, kb, key = *jax.random.split(key, 3), jax.random.split(key, 4)[3]
    x = jax.random.normal(kx, (B, C_IN, L), dtype=jnp.float32)
    weight = jax.random.normal(kw, (EMBED_DIM, C_IN, PATCH_SIZE), dtype=jnp.float32) * 0.02
    bias = jax.random.normal(kb, (EMBED_DIM,), dtype=jnp.float32) * 0.02

    out = jax.block_until_ready(patch_embed(x, weight, bias, PATCH_SIZE))
    ref = _reference(x, weight, bias, PATCH_SIZE)
    assert out.shape == (B, L // PATCH_SIZE, EMBED_DIM)
    assert jnp.allclose(out, ref, atol=1e-5, rtol=1e-5)

    # ---- Test 2: N not divisible by TN (partial last tile) + lane-dense E ----
    B2, C2, P2, N2, E2 = 2, 3, 4, 36, 256
    kx2, kw2, kb2 = jax.random.split(jax.random.PRNGKey(1), 3)
    x2 = jax.random.normal(kx2, (B2, C2, N2 * P2), dtype=jnp.float32)
    w2 = jax.random.normal(kw2, (E2, C2, P2), dtype=jnp.float32) * 0.02
    b2 = jax.random.normal(kb2, (E2,), dtype=jnp.float32) * 0.02
    ref2 = _reference(x2, w2, b2, P2)

    out2 = jax.block_until_ready(patch_embed(x2, w2, b2, P2, tile_n=16))
    assert out2.shape == (B2, N2, E2)
    assert jnp.allclose(out2, ref2, atol=1e-5, rtol=1e-5)

    # bf16 MXU operands (x cast in-kernel, f32 accumulate) + bf16 output.
    out2_bf16 = jax.block_until_ready(
        patch_embed(x2, w2, b2, P2, tile_n=16,
                    compute_dtype=jnp.bfloat16, out_dtype=jnp.bfloat16))
    assert out2_bf16.dtype == jnp.bfloat16
    assert jnp.allclose(out2_bf16.astype(jnp.float32), ref2, atol=2e-2, rtol=2e-2)

    print("KERNEL_OK")
</pallas_src>

<mosaic_0001>
module attributes {stable_mosaic.version = 11 : i64} {
  func.func @_patch_embed_kernel(%arg0: i32, %arg1: i32, %arg2: i32, %arg3: memref<1x4x4x4xf32, #tpu.memory_space<vmem>>, %arg4: memref<4x4x128xf32, #tpu.memory_space<vmem>>, %arg5: memref<1x128xf32, #tpu.memory_space<vmem>>, %arg6: memref<1x4x128xf32, #tpu.memory_space<vmem>>) attributes {dimension_semantics = [#tpu.dimension_semantics<parallel>, #tpu.dimension_semantics<parallel>, #tpu.dimension_semantics<parallel>], iteration_bounds = array<i64: 2, 1, 1>, scalar_prefetch = 0 : i64, scratch_operands = 0 : i64, tpu.core_type = #tpu.core_type<tc>, window_params = [{transform_indices = @transform_0, window_bounds = array<i64: 1, 4, 4, 4>}, {transform_indices = @transform_1, window_bounds = array<i64: 4, 4, 128>}, {transform_indices = @transform_2, window_bounds = array<i64: 1, 128>}, {transform_indices = @transform_3, window_bounds = array<i64: 1, 4, 128>}]} {
    %c0 = arith.constant 0 : index
    %c0_0 = arith.constant 0 : index
    %c0_1 = arith.constant 0 : index
    %c0_2 = arith.constant 0 : index
    %0 = vector.load %arg3[%c0, %c0_0, %c0_1, %c0_2] : memref<1x4x4x4xf32, #tpu.memory_space<vmem>>, vector<1x1x4x4xf32>
    %1 = vector.shape_cast %0 : vector<1x1x4x4xf32> to vector<4x4xf32>
    %c0_3 = arith.constant 0 : index
    %c0_4 = arith.constant 0 : index
    %c0_5 = arith.constant 0 : index
    %2 = vector.load %arg4[%c0_3, %c0_4, %c0_5] : memref<4x4x128xf32, #tpu.memory_space<vmem>>, vector<1x4x128xf32>
    %3 = vector.shape_cast %2 : vector<1x4x128xf32> to vector<4x128xf32>
    %cst = arith.constant dense<0.000000e+00> : vector<4x128xf32>
    %4 = tpu.matmul %1, %3, %cst {dimension_numbers = #tpu.dot_dimension_numbers<[1], [0], [0], [1], [0, 0, 1, 1], [], []>} : vector<4x4xf32>, vector<4x128xf32>, vector<4x128xf32> -> vector<4x128xf32>
    %c0_6 = arith.constant 0 : index
    %c1 = arith.constant 1 : index
    %c0_7 = arith.constant 0 : index
    %c0_8 = arith.constant 0 : index
    %5 = vector.load %arg3[%c0_6, %c1, %c0_7, %c0_8] : memref<1x4x4x4xf32, #tpu.memory_space<vmem>>, vector<1x1x4x4xf32>
    %6 = vector.shape_cast %5 : vector<1x1x4x4xf32> to vector<4x4xf32>
    %c1_9 = arith.constant 1 : index
    %c0_10 = arith.constant 0 : index
    %c0_11 = arith.constant 0 : index
    %7 = vector.load %arg4[%c1_9, %c0_10, %c0_11] : memref<4x4x128xf32, #tpu.memory_space<vmem>>, vector<1x4x128xf32>
    %8 = vector.shape_cast %7 : vector<1x4x128xf32> to vector<4x128xf32>
    %cst_12 = arith.constant dense<0.000000e+00> : vector<4x128xf32>
    %9 = tpu.matmul %6, %8, %cst_12 {dimension_numbers = #tpu.dot_dimension_numbers<[1], [0], [0], [1], [0, 0, 1, 1], [], []>} : vector<4x4xf32>, vector<4x128xf32>, vector<4x128xf32> -> vector<4x128xf32>
    %10 = arith.addf %4, %9 : vector<4x128xf32>
    %c0_13 = arith.constant 0 : index
    %c2 = arith.constant 2 : index
    %c0_14 = arith.constant 0 : index
    %c0_15 = arith.constant 0 : index
    %11 = vector.load %arg3[%c0_13, %c2, %c0_14, %c0_15] : memref<1x4x4x4xf32, #tpu.memory_space<vmem>>, vector<1x1x4x4xf32>
    %12 = vector.shape_cast %11 : vector<1x1x4x4xf32> to vector<4x4xf32>
    %c2_16 = arith.constant 2 : index
    %c0_17 = arith.constant 0 : index
    %c0_18 = arith.constant 0 : index
    %13 = vector.load %arg4[%c2_16, %c0_17, %c0_18] : memref<4x4x128xf32, #tpu.memory_space<vmem>>, vector<1x4x128xf32>
    %14 = vector.shape_cast %13 : vector<1x4x128xf32> to vector<4x128xf32>
    %cst_19 = arith.constant dense<0.000000e+00> : vector<4x128xf32>
    %15 = tpu.matmul %12, %14, %cst_19 {dimension_numbers = #tpu.dot_dimension_numbers<[1], [0], [0], [1], [0, 0, 1, 1], [], []>} : vector<4x4xf32>, vector<4x128xf32>, vector<4x128xf32> -> vector<4x128xf32>
    %16 = arith.addf %10, %15 : vector<4x128xf32>
    %c0_20 = arith.constant 0 : index
    %c3 = arith.constant 3 : index
    %c0_21 = arith.constant 0 : index
    %c0_22 = arith.constant 0 : index
    %17 = vector.load %arg3[%c0_20, %c3, %c0_21, %c0_22] : memref<1x4x4x4xf32, #tpu.memory_space<vmem>>, vector<1x1x4x4xf32>
    %18 = vector.shape_cast %17 : vector<1x1x4x4xf32> to vector<4x4xf32>
    %c3_23 = arith.constant 3 : index
    %c0_24 = arith.constant 0 : index
    %c0_25 = arith.constant 0 : index
    %19 = vector.load %arg4[%c3_23, %c0_24, %c0_25] : memref<4x4x128xf32, #tpu.memory_space<vmem>>, vector<1x4x128xf32>
    %20 = vector.shape_cast %19 : vector<1x4x128xf32> to vector<4x128xf32>
    %cst_26 = arith.constant dense<0.000000e+00> : vector<4x128xf32>
    %21 = tpu.matmul %18, %20, %cst_26 {dimension_numbers = #tpu.dot_dimension_numbers<[1], [0], [0], [1], [0, 0, 1, 1], [], []>} : vector<4x4xf32>, vector<4x128xf32>, vector<4x128xf32> -> vector<4x128xf32>
    %22 = arith.addf %16, %21 : vector<4x128xf32>
    %c0_27 = arith.constant 0 : index
    %c0_28 = arith.constant 0 : index
    %23 = vector.load %arg5[%c0_27, %c0_28] : memref<1x128xf32, #tpu.memory_space<vmem>>, vector<1x128xf32>
    %24 = vector.broadcast %23 : vector<1x128xf32> to vector<4x128xf32>
    %25 = arith.addf %22, %24 : vector<4x128xf32>
    %c0_29 = arith.constant 0 : index
    %c0_30 = arith.constant 0 : index
    %c0_31 = arith.constant 0 : index
    %26 = vector.load %arg6[%c0_29, %c0_30, %c0_31] : memref<1x4x128xf32, #tpu.memory_space<vmem>>, vector<1x4x128xf32>
    %27 = vector.shape_cast %26 : vector<1x4x128xf32> to vector<4x128xf32>
    %28 = vector.shape_cast %25 : vector<4x128xf32> to vector<1x4x128xf32>
    tpu.vector_store %arg6[%c0_29, %c0_30, %c0_31], %28 {strides = array<i32>} : memref<1x4x128xf32, #tpu.memory_space<vmem>>, vector<1x4x128xf32>,
    return
  }
  func.func @transform_0(%arg0: i32, %arg1: i32, %arg2: i32) -> (i32, i32, i32, i32) {
    %c0_i32 = arith.constant 0 : i32
    %c0_i32_0 = arith.constant 0 : i32
    %c0_i32_1 = arith.constant 0 : i32
    return %arg0, %c0_i32, %arg1, %c0_i32_0 : i32, i32, i32, i32
  }
  func.func @transform_1(%arg0: i32, %arg1: i32, %arg2: i32) -> (i32, i32, i32) {
    %c0_i32 = arith.constant 0 : i32
    %c0_i32_0 = arith.constant 0 : i32
    %c0_i32_1 = arith.constant 0 : i32
    return %c0_i32, %c0_i32_0, %arg2 : i32, i32, i32
  }
  func.func @transform_2(%arg0: i32, %arg1: i32, %arg2: i32) -> (i32, i32) {
    %c0_i32 = arith.constant 0 : i32
    %c0_i32_0 = arith.constant 0 : i32
    return %c0_i32, %arg2 : i32, i32
  }
  func.func @transform_3(%arg0: i32, %arg1: i32, %arg2: i32) -> (i32, i32, i32) {
    %c0_i32 = arith.constant 0 : i32
    return %arg0, %arg1, %arg2 : i32, i32, i32
  }
}

</mosaic_0001>

<llo_original>
// kernel: tpu_custom_call.1
$region0: #{tpu_custom_call.1}
  #allocation0 [shape = 'u32[]', space=smem, size = 0x4, offset = 0x4, fixed_abs, tag = 'smem constant byte address 0x4 - core index']
  #allocation1 [shape = 'u32[144,128]{1,0:T(1,128)}', space=vmem, size = 0x12000, scoped, tag = 'internal scratch']
  %s0 = inlined_call_operand.hbm [shape: f32[2,4,4,4], index: 0, kind: input, shape index: {}]
  %s1 = inlined_call_operand.hbm [shape: f32[4,4,128], index: 1, kind: input, shape index: {}]
  %s2 = inlined_call_operand.vmem [shape: f32[1,128], index: 2, kind: input, shape index: {}]
  %s3 = inlined_call_operand.hbm [shape: f32[2,4,128], index: 3, kind: output, shape index: {}]
  %s4 = sld [smem:[#allocation0]]
  $region53: #{tpu_custom_call.1} parent=0
    _
  %s6 = ssub.s32 1, %s4
  %s7 = scalar_select 0, %s6, %s4
  $region1: #{tpu_custom_call.1} parent=0
    #allocation2 [shape = 'u8[16384]{0}', space=vmem, size = 0x4000, scoped, tag = 'input window, operand 0']
    #allocation3 [shape = 's32[2]{0}', space=sflag, size = 0x8, scoped, tag = 'scoped memory for tpu_custom_call.1']
    #allocation4 [shape = 's32[2]{0}', space=sflag, size = 0x8, scoped, tag = 'scoped memory for tpu_custom_call.1']
    #allocation5 [shape = 'u8[8192]{0}', space=vmem, size = 0x2000, scoped, tag = 'input window, operand 1, single buffered']
    #allocation6 [shape = 's32[1]{0}', space=sflag, size = 0x4, scoped, tag = 'scoped memory for tpu_custom_call.1']
    #allocation7 [shape = 'u8[4096]{0}', space=vmem, size = 0x1000, scoped, tag = 'output window, operand 0']
    %8 = vsyncpa [#allocation3], 0
    %s9 = scalar_lea.sflag [#allocation3], 1
    %10 = vsyncpa %s9, 0
    %11 = vsyncpa [#allocation6], 0
    %12 = vsyncpa [#allocation4], 0
    %s13 = scalar_lea.sflag [#allocation4], 1
    %14 = vsyncpa %s13, 0
    loop: start=0, step=1, limit=4
    $region2: #{tpu_custom_call.1} parent=1 // loop_pre_header
      _
    $region3: #{tpu_custom_call.1} parent=1 // loop_header
      %s16 = sphi 0, %s20
      %p17 = scmp.ge.s32.totalorder %s16, 4
      %s23 = sphi 0, %s42
      %s24 = sphi 0, %s38
      %s25 = sphi 0, %s34
      %s26 = sphi 0, %s23
      %s27 = sphi 0, %s24
      %s28 = sphi 0, %s25
      %s29 = sphi 0, %s26
      %s30 = sphi 0, %s27
      %s31 = sphi 0, %s28
      %s47 = sphi 0, %s49
      %s50 = sphi 0, %s47
      %s51 = sphi 0, %s50
      %s67 = sphi 0, %s51
      %s73 = sphi 0, %s75
      %s76 = sphi 0, %s73
      %s77 = sphi 0, %s76
      %s93 = sphi 0, %s77
      %s99 = sphi 0, %s101
      %s102 = sphi 0, %s99
      %s103 = sphi 0, %s102
      %s119 = sphi 0, %s103
      %s129 = sphi 0, %s131
      %s132 = sphi 0, %s129
      %s133 = sphi 0, %s132
      %s149 = sphi 0, %s133
    $region4: #{tpu_custom_call.1} parent=1 // loop_header_branch
      %19 = sbr.rel (%p17) target = $region8
    $region5: #{tpu_custom_call.1} parent=1 // loop_body
      %s21 = ssub.s32 %s16, 1
      %s22 = ssub.s32 %s16, 2
      %s32 = sadd.s32 1, %s25
      %p33 = scmp.ge.s32.totalorder %s32, 1
      %s34 = scalar_select %p33, 0, %s32
      %s35 = sadd.s32 1, %s24
      %s36 = scalar_select %p33, %s35, %s24
      %p37 = scmp.ge.s32.totalorder %s36, 1
      %s38 = scalar_select %p37, 0, %s36
      %s39 = sadd.s32 1, %s23
      %s40 = scalar_select %p37, %s39, %s23
      %p41 = scmp.ge.s32.totalorder %s40, 2
      %s42 = scalar_select %p41, 0, %s40
      %s43 = ssub.s32 %s23, %s42
      %s44 = ssub.s32 %s24, %s38
      %s45 = sor.u32 %s43, %s44
      %p46 = scmp.eq.s32.totalorder %s45, 0
      %s48 = sadd.s32 %s47, 1
      %s49 = scalar_select %p46, %s47, %s48
      %p52 = pneg %p46
      %p53 = scmp.eq.s32.totalorder %s16, 1
      %p54 = por %p52, %p53
      %p55 = scmp.ne.s32.totalorder %s47, %s50
      %p56 = scmp.eq.s32.totalorder %s16, 0
      %p57 = por %p55, %p56
      %p58 = scmp.ne.s32.totalorder %s47, %s50
      %p59 = scmp.eq.s32.totalorder %s21, 1
      %p60 = por %p58, %p59
      %p61 = scmp.ne.s32.totalorder %s50, %s51
      %p62 = scmp.eq.s32.totalorder %s21, 0
      %p63 = por %p61, %p62
      %p64 = scmp.ne.s32.totalorder %s50, %s51
      %p65 = scmp.eq.s32.totalorder %s22, 1
      %p66 = por %p64, %p65
      %p68 = scmp.ne.s32.totalorder %s51, %s67
      %p69 = scmp.eq.s32.totalorder %s22, 0
      %p70 = por %p68, %p69
      %s71 = ssub.s32 %s25, %s34
      %p72 = scmp.eq.s32.totalorder %s71, 0
      %s74 = sadd.s32 %s73, 1
      %s75 = scalar_select %p72, %s73, %s74
      %p78 = pneg %p72
      %p79 = scmp.eq.s32.totalorder %s16, 1
      %p80 = por %p78, %p79
      %p81 = scmp.ne.s32.totalorder %s73, %s76
      %p82 = scmp.eq.s32.totalorder %s16, 0
      %p83 = por %p81, %p82
      %p84 = scmp.ne.s32.totalorder %s73, %s76
      %p85 = scmp.eq.s32.totalorder %s21, 1
      %p86 = por %p84, %p85
      %p87 = scmp.ne.s32.totalorder %s76, %s77
      %p88 = scmp.eq.s32.totalorder %s21, 0
      %p89 = por %p87, %p88
      %p90 = scmp.ne.s32.totalorder %s76, %s77
      %p91 = scmp.eq.s32.totalorder %s22, 1
      %p92 = por %p90, %p91
      %p94 = scmp.ne.s32.totalorder %s77, %s93
      %p95 = scmp.eq.s32.totalorder %s22, 0
      %p96 = por %p94, %p95
      %s97 = ssub.s32 %s25, %s34
      %p98 = scmp.eq.s32.totalorder %s97, 0
      %s100 = sadd.s32 %s99, 1
      %s101 = scalar_select %p98, %s99, %s100
      %p104 = pneg %p98
      %p105 = scmp.eq.s32.totalorder %s16, 1
      %p106 = por %p104, %p105
      %p107 = scmp.ne.s32.totalorder %s99, %s102
      %p108 = scmp.eq.s32.totalorder %s16, 0
      %p109 = por %p107, %p108
      %p110 = scmp.ne.s32.totalorder %s99, %s102
      %p111 = scmp.eq.s32.totalorder %s21, 1
      %p112 = por %p110, %p111
      %p113 = scmp.ne.s32.totalorder %s102, %s103
      %p114 = scmp.eq.s32.totalorder %s21, 0
      %p115 = por %p113, %p114
      %p116 = scmp.ne.s32.totalorder %s102, %s103
      %p117 = scmp.eq.s32.totalorder %s22, 1
      %p118 = por %p116, %p117
      %p120 = scmp.ne.s32.totalorder %s103, %s119
      %p121 = scmp.eq.s32.totalorder %s22, 0
      %p122 = por %p120, %p121
      %s123 = ssub.s32 %s23, %s42
      %s124 = ssub.s32 %s24, %s38
      %s125 = sor.u32 %s123, %s124
      %s126 = ssub.s32 %s25, %s34
      %s127 = sor.u32 %s125, %s126
      %p128 = scmp.eq.s32.totalorder %s127, 0
      %s130 = sadd.s32 %s129, 1
      %s131 = scalar_select %p128, %s129, %s130
      %p134 = pneg %p128
      %p135 = scmp.eq.s32.totalorder %s16, 1
      %p136 = por %p134, %p135
      %p137 = scmp.ne.s32.totalorder %s129, %s132
      %p138 = scmp.eq.s32.totalorder %s16, 0
      %p139 = por %p137, %p138
      %p140 = scmp.ne.s32.totalorder %s129, %s132
      %p141 = scmp.eq.s32.totalorder %s21, 1
      %p142 = por %p140, %p141
      %p143 = scmp.ne.s32.totalorder %s132, %s133
      %p144 = scmp.eq.s32.totalorder %s21, 0
      %p145 = por %p143, %p144
      %p146 = scmp.ne.s32.totalorder %s132, %s133
      %p147 = scmp.eq.s32.totalorder %s22, 1
      %p148 = por %p146, %p147
      %p150 = scmp.ne.s32.totalorder %s133, %s149
      %p151 = scmp.eq.s32.totalorder %s22, 0
      %p152 = por %p150, %p151
      %p153 = scmp.le.s32.totalorder 1, %s16
      %p154 = scmp.lt.s32.totalorder %s16, 3
      %p155 = pnand %p153, %p154
      %p156 = pneg %p155
      // Predicated region
      $region9: #{tpu_custom_call.1} parent=5 // pred_check
        _
      $region10: #{tpu_custom_call.1} parent=5 // pred_check_branch
        %158 = sbr.rel (%p155) target = $region12
      $region11: #{tpu_custom_call.1} parent=5 // pred_region
        %s159 = ssub.s32 %s16, 1
        // Predicated region
        $region13: #{tpu_custom_call.1} parent=11 // pred_check
          %p160 = pneg %p89
        $region14: #{tpu_custom_call.1} parent=11 // pred_check_branch
          %162 = sbr.rel (%p160) target = $region16
        $region15: #{tpu_custom_call.1} parent=11 // pred_region
          %s164 = ssub.s32 256, 256
          %165 = vsyncadd [#allocation6], %s164
          %s166 = smul.addr %s28, 64
          %s167 = scalar_lea.hbm %s1, %s166
          %s168 = sshll.u32 [#allocation5], 4
          %s169 = int_to_ptr.vmem [resolvable:$true] %s168
          %174 = dma.hbm_to_vmem [thread:$0]  %s167, 256, %s169, [#allocation6], 64, 64, 4
        $region16: #{tpu_custom_call.1} parent=11 // pred_fallthru
          _
        // Predicated region
        $region17: #{tpu_custom_call.1} parent=11 // pred_check
          %p175 = pneg %p115
        $region18: #{tpu_custom_call.1} parent=11 // pred_check_branch
          %177 = sbr.rel (%p175) target = $region20
        $region19: #{tpu_custom_call.1} parent=11 // pred_region
          %p178 = scmp.lt.s32.totalorder %s28, 0
          %s179 = scalar_select %p178, %s28, 0
          %s180 = scalar_lea.vmem %s2, %s179
        $region20: #{tpu_custom_call.1} parent=11 // pred_fallthru
          _
      $region12: #{tpu_custom_call.1} parent=5 // pred_fallthru
        _
      %p181 = scmp.lt.s32.totalorder %s16, 2
      // Predicated region
      $region21: #{tpu_custom_call.1} parent=5 // pred_check
        %p182 = pneg %p181
      $region22: #{tpu_custom_call.1} parent=5 // pred_check_branch
        %184 = sbr.rel (%p182) target = $region24
      $region23: #{tpu_custom_call.1} parent=5 // pred_region
        // Predicated region
        $region25: #{tpu_custom_call.1} parent=23 // pred_check
          %p185 = pneg %p57
        $region26: #{tpu_custom_call.1} parent=23 // pred_check_branch
          %187 = sbr.rel (%p185) target = $region28
        $region27: #{tpu_custom_call.1} parent=23 // pred_region
          %s188 = sand.u32 %s47, 1
          %s189 = scalar_lea.sflag [#allocation3], %s188
          %s190 = sand.u32 %s47, 1
          %s191 = smul.addr %s190, 16
          %s192 = scalar_lea.vmem [#allocation2], %s191
          %s194 = ssub.s32 256, 256
          %195 = vsyncadd %s189, %s194
          %s196 = smul.addr %s23, 4
          %s197 = sadd.s32 %s24, %s196
          %s198 = smul.addr %s197, 64
          %s199 = scalar_lea.hbm %s0, %s198
          %s200 = sshll.u32 %s192, 4
          %s201 = int_to_ptr.vmem [resolvable:$true] %s200
          %206 = dma.hbm_to_vmem [thread:$0]  %s199, 256, %s201, %s189, 64, 64, 4
        $region28: #{tpu_custom_call.1} parent=23 // pred_fallthru
          _
      $region24: #{tpu_custom_call.1} parent=5 // pred_fallthru
        _
      %p207 = scmp.le.s32.totalorder 1, %s16
      %p208 = scmp.lt.s32.totalorder %s16, 3
      %p209 = pnand %p207, %p208
      %p210 = pneg %p209
      // Predicated region
      $region29: #{tpu_custom_call.1} parent=5 // pred_check
        _
      $region30: #{tpu_custom_call.1} parent=5 // pred_check_branch
        %212 = sbr.rel (%p209) target = $region32
      $region31: #{tpu_custom_call.1} parent=5 // pred_region
        %s213 = ssub.s32 %s16, 1
        %s214 = sand.u32 %s50, 1
        %s215 = scalar_lea.sflag [#allocation3], %s214
        %s216 = sand.u32 %s50, 1
        %s217 = smul.addr %s216, 16
        %s218 = scalar_lea.vmem [#allocation2], %s217
        // Predicated region
        $region33: #{tpu_custom_call.1} parent=31 // pred_check
          %p219 = pneg %p63
        $region34: #{tpu_custom_call.1} parent=31 // pred_check_branch
          %221 = sbr.rel (%p219) target = $region36
        $region35: #{tpu_custom_call.1} parent=31 // pred_region
          %222 = dma.done %s215, 256
        $region36: #{tpu_custom_call.1} parent=31 // pred_fallthru
          _
        // Predicated region
        $region37: #{tpu_custom_call.1} parent=31 // pred_check
          %p223 = pneg %p89
        $region38: #{tpu_custom_call.1} parent=31 // pred_check_branch
          %225 = sbr.rel (%p223) target = $region40
        $region39: #{tpu_custom_call.1} parent=31 // pred_region
          %226 = dma.done [#allocation6], 256
        $region40: #{tpu_custom_call.1} parent=31 // pred_fallthru
          _
        %s227 = sand.u32 %s50, 1
        %s228 = scalar_lea.sflag [#allocation3], %s227
        %s229 = sand.u32 %s50, 1
        %s230 = smul.addr %s229, 16
        %s231 = scalar_lea.vmem [#allocation2], %s230
        %p232 = pneg %p63
        %p233 = pneg %p60
        %p234 = pneg %p89
        %p235 = pneg %p86
        %p236 = scmp.lt.s32.totalorder %s28, 0
        %s237 = scalar_select %p236, %s28, 0
        %s238 = scalar_lea.vmem %s2, %s237
        %p239 = pneg %p115
        %p240 = pneg %p112
        %p241 = pneg %p145
        %p242 = pneg %p142
        %s243 = sand.u32 %s132, 1
        %s244 = scalar_lea.sflag [#allocation4], %s243
        %s245 = sand.u32 %s132, 1
        %s246 = smul.addr %s245, 4
        %s247 = scalar_lea.vmem [#allocation7], %s246
        %p248 = scmp.lt.s32.totalorder %s28, 0
        %s249 = scalar_select %p248, %s28, 0
        %s250 = scalar_lea.vmem %s2, %s249
        %v251 = vld [vmem:[%s218] sm:$0xf]
        %v252 = vld [vmem:[#allocation5] sm:$0xf]
        %s253 = scalar_lea.vmem %s218, 4 [#allocation2]
        %v254 = vld [vmem:[%s253] sm:$0xf]
        %s255 = scalar_lea.vmem [#allocation5], 4
        %v256 = vld [vmem:[%s255] sm:$0xf]
        %vm257 = vcmask 31744
        %v259 = vsel %vm257, %v254, 0
        %vm261 = vcmask 1043456
        %v263 = vsel %vm261, %v256, 0
        %265 = vmatprep.subr.mxu0 0.0
        %266 = vmatpush1.msra.mxu0 %v263
        %267 = vmatprep.subr.mxu0 0.0
        %268 = vmatpush1.msra.mxu0 0.0
        %269 = vmatprep.subr.mxu0 0.0
        %270 = vmatpush1.msra.mxu0 0.0
        %271 = vmatprep.subr.mxu0 0.0
        %272 = vmatpush1.msra.mxu0 0.0
        %273 = vmatprep.subr.mxu0 0.0
        %274 = vmatpush1.msra.mxu0 0.0
        %275 = vmatprep.subr.mxu0 0.0
        %276 = vmatpush1.msra.mxu0 0.0
        %277 = vmatprep.subr.mxu0 0.0
        %278 = vmatpush1.msra.mxu0 0.0
        %279 = vmatprep.subr.mxu0 0.0
        %280 = vmatpush1.msra.mxu0 0.0
        %281 = vmatprep.subr.mxu0 0.0
        %282 = vmatpush1.msra.mxu0 0.0
        %283 = vmatprep.subr.mxu0 0.0
        %284 = vmatpush1.msra.mxu0 0.0
        %285 = vmatprep.subr.mxu0 0.0
        %286 = vmatpush1.msra.mxu0 0.0
        %287 = vmatprep.subr.mxu0 0.0
        %288 = vmatpush1.msra.mxu0 0.0
        %289 = vmatprep.subr.mxu0 0.0
        %290 = vmatpush1.msra.mxu0 0.0
        %291 = vmatprep.subr.mxu0 0.0
        %292 = vmatpush1.msra.mxu0 0.0
        %293 = vmatprep.subr.mxu0 0.0
        %294 = vmatpush1.msra.mxu0 0.0
        %295 = vmatprep.subr.mxu0 0.0
        %296 = vmatpush1.msra.mxu0 0.0
        %297 = vmatprep.subr.mxu0 0.0
        %298 = vmatpush1.msra.mxu0 0.0
        %299 = vmatprep.subr.mxu0 0.0
        %300 = vmatpush1.msra.mxu0 0.0
        %301 = vmatprep.subr.mxu0 0.0
        %302 = vmatpush1.msra.mxu0 0.0
        %303 = vmatprep.subr.mxu0 0.0
        %304 = vmatpush1.msra.mxu0 0.0
        %305 = vmatprep.subr.mxu0 0.0
        %306 = vmatpush1.msra.mxu0 0.0
        %307 = vmatprep.subr.mxu0 0.0
        %308 = vmatpush1.msra.mxu0 0.0
        %309 = vmatprep.subr.mxu0 0.0
        %310 = vmatpush1.msra.mxu0 0.0
        %311 = vmatprep.subr.mxu0 0.0
        %312 = vmatpush1.msra.mxu0 0.0
        %313 = vmatprep.subr.mxu0 0.0
        %314 = vmatpush1.msra.mxu0 0.0
        %315 = vmatprep.subr.mxu0 0.0
        %316 = vmatpush1.msra.mxu0 0.0
        %317 = vmatprep.subr.mxu0 0.0
        %318 = vmatpush1.msra.mxu0 0.0
        %319 = vmatprep.subr.mxu0 0.0
        %320 = vmatpush1.msra.mxu0 0.0
        %321 = vmatprep.subr.mxu0 0.0
        %322 = vmatpush1.msra.mxu0 0.0
        %323 = vmatprep.subr.mxu0 0.0
        %324 = vmatpush1.msra.mxu0 0.0
        %325 = vmatprep.subr.mxu0 0.0
        %326 = vmatpush1.msra.mxu0 0.0
        %327 = vmatprep.subr.mxu0 0.0
        %328 = vmatpush1.msra.mxu0 0.0
        %329 = vmatprep.mubr.f32.mxu0 0.0
        %330 = vmatmul.mubr.f32.gmra.mrb[0].mxu0 %v259
        %v331 = vpop.f32.mrb[0].mxu0
        %v332 = vadd.f32 0.0, %v331
        %v333 = vpop.f32.mrb[0].mxu0
        %334 = vdwg.mxu0
        %v336 = vsel %vm257, %v251, 0
        %v339 = vsel %vm261, %v252, 0
        %341 = vmatprep.subr.mxu0 0.0
        %342 = vmatpush1.msra.mxu0 %v339
        %343 = vmatprep.subr.mxu0 0.0
        %344 = vmatpush1.msra.mxu0 0.0
        %345 = vmatprep.subr.mxu0 0.0
        %346 = vmatpush1.msra.mxu0 0.0
        %347 = vmatprep.subr.mxu0 0.0
        %348 = vmatpush1.msra.mxu0 0.0
        %349 = vmatprep.subr.mxu0 0.0
        %350 = vmatpush1.msra.mxu0 0.0
        %351 = vmatprep.subr.mxu0 0.0
        %352 = vmatpush1.msra.mxu0 0.0
        %353 = vmatprep.subr.mxu0 0.0
        %354 = vmatpush1.msra.mxu0 0.0
        %355 = vmatprep.subr.mxu0 0.0
        %356 = vmatpush1.msra.mxu0 0.0
        %357 = vmatprep.subr.mxu0 0.0
        %358 = vmatpush1.msra.mxu0 0.0
        %359 = vmatprep.subr.mxu0 0.0
        %360 = vmatpush1.msra.mxu0 0.0
        %361 = vmatprep.subr.mxu0 0.0
        %362 = vmatpush1.msra.mxu0 0.0
        %363 = vmatprep.subr.mxu0 0.0
        %364 = vmatpush1.msra.mxu0 0.0
        %365 = vmatprep.subr.mxu0 0.0
        %366 = vmatpush1.msra.mxu0 0.0
        %367 = vmatprep.subr.mxu0 0.0
        %368 = vmatpush1.msra.mxu0 0.0
        %369 = vmatprep.subr.mxu0 0.0
        %370 = vmatpush1.msra.mxu0 0.0
        %371 = vmatprep.subr.mxu0 0.0
        %372 = vmatpush1.msra.mxu0 0.0
        %373 = vmatprep.subr.mxu0 0.0
        %374 = vmatpush1.msra.mxu0 0.0
        %375 = vmatprep.subr.mxu0 0.0
        %376 = vmatpush1.msra.mxu0 0.0
        %377 = vmatprep.subr.mxu0 0.0
        %378 = vmatpush1.msra.mxu0 0.0
        %379 = vmatprep.subr.mxu0 0.0
        %380 = vmatpush1.msra.mxu0 0.0
        %381 = vmatprep.subr.mxu0 0.0
        %382 = vmatpush1.msra.mxu0 0.0
        %383 = vmatprep.subr.mxu0 0.0
        %384 = vmatpush1.msra.mxu0 0.0
        %385 = vmatprep.subr.mxu0 0.0
        %386 = vmatpush1.msra.mxu0 0.0
        %387 = vmatprep.subr.mxu0 0.0
        %388 = vmatpush1.msra.mxu0 0.0
        %389 = vmatprep.subr.mxu0 0.0
        %390 = vmatpush1.msra.mxu0 0.0
        %391 = vmatprep.subr.mxu0 0.0
        %392 = vmatpush1.msra.mxu0 0.0
        %393 = vmatprep.subr.mxu0 0.0
        %394 = vmatpush1.msra.mxu0 0.0
        %395 = vmatprep.subr.mxu0 0.0
        %396 = vmatpush1.msra.mxu0 0.0
        %397 = vmatprep.subr.mxu0 0.0
        %398 = vmatpush1.msra.mxu0 0.0
        %399 = vmatprep.subr.mxu0 0.0
        %400 = vmatpush1.msra.mxu0 0.0
        %401 = vmatprep.subr.mxu0 0.0
        %402 = vmatpush1.msra.mxu0 0.0
        %403 = vmatprep.subr.mxu0 0.0
        %404 = vmatpush1.msra.mxu0 0.0
        %405 = vmatprep.mubr.f32.mxu0 0.0
        %406 = vmatmul.mubr.f32.gmra.mrb[0].mxu0 %v336
        %v407 = vpop.f32.mrb[0].mxu0
        %v408 = vadd.f32 %v332, %v407
        %v409 = vpop.f32.mrb[0].mxu0
        %410 = vdwg.mxu0
        %s411 = scalar_lea.vmem %s218, 8 [#allocation2]
        %v412 = vld [vmem:[%s411] sm:$0xf]
        %s413 = scalar_lea.vmem [#allocation5], 8
        %v414 = vld [vmem:[%s413] sm:$0xf]
        %v416 = vsel %vm257, %v412, 0
        %v419 = vsel %vm261, %v414, 0
        %421 = vmatprep.subr.mxu0 0.0
        %422 = vmatpush1.msra.mxu0 %v419
        %423 = vmatprep.subr.mxu0 0.0
        %424 = vmatpush1.msra.mxu0 0.0
        %425 = vmatprep.subr.mxu0 0.0
        %426 = vmatpush1.msra.mxu0 0.0
        %427 = vmatprep.subr.mxu0 0.0
        %428 = vmatpush1.msra.mxu0 0.0
        %429 = vmatprep.subr.mxu0 0.0
        %430 = vmatpush1.msra.mxu0 0.0
        %431 = vmatprep.subr.mxu0 0.0
        %432 = vmatpush1.msra.mxu0 0.0
        %433 = vmatprep.subr.mxu0 0.0
        %434 = vmatpush1.msra.mxu0 0.0
        %435 = vmatprep.subr.mxu0 0.0
        %436 = vmatpush1.msra.mxu0 0.0
        %437 = vmatprep.subr.mxu0 0.0
        %438 = vmatpush1.msra.mxu0 0.0
        %439 = vmatprep.subr.mxu0 0.0
        %440 = vmatpush1.msra.mxu0 0.0
        %441 = vmatprep.subr.mxu0 0.0
        %442 = vmatpush1.msra.mxu0 0.0
        %443 = vmatprep.subr.mxu0 0.0
        %444 = vmatpush1.msra.mxu0 0.0
        %445 = vmatprep.subr.mxu0 0.0
        %446 = vmatpush1.msra.mxu0 0.0
        %447 = vmatprep.subr.mxu0 0.0
        %448 = vmatpush1.msra.mxu0 0.0
        %449 = vmatprep.subr.mxu0 0.0
        %450 = vmatpush1.msra.mxu0 0.0
        %451 = vmatprep.subr.mxu0 0.0
        %452 = vmatpush1.msra.mxu0 0.0
        %453 = vmatprep.subr.mxu0 0.0
        %454 = vmatpush1.msra.mxu0 0.0
        %455 = vmatprep.subr.mxu0 0.0
        %456 = vmatpush1.msra.mxu0 0.0
        %457 = vmatprep.subr.mxu0 0.0
        %458 = vmatpush1.msra.mxu0 0.0
        %459 = vmatprep.subr.mxu0 0.0
        %460 = vmatpush1.msra.mxu0 0.0
        %461 = vmatprep.subr.mxu0 0.0
        %462 = vmatpush1.msra.mxu0 0.0
        %463 = vmatprep.subr.mxu0 0.0
        %464 = vmatpush1.msra.mxu0 0.0
        %465 = vmatprep.subr.mxu0 0.0
        %466 = vmatpush1.msra.mxu0 0.0
        %467 = vmatprep.subr.mxu0 0.0
        %468 = vmatpush1.msra.mxu0 0.0
        %469 = vmatprep.subr.mxu0 0.0
        %470 = vmatpush1.msra.mxu0 0.0
        %471 = vmatprep.subr.mxu0 0.0
        %472 = vmatpush1.msra.mxu0 0.0
        %473 = vmatprep.subr.mxu0 0.0
        %474 = vmatpush1.msra.mxu0 0.0
        %475 = vmatprep.subr.mxu0 0.0
        %476 = vmatpush1.msra.mxu0 0.0
        %477 = vmatprep.subr.mxu0 0.0
        %478 = vmatpush1.msra.mxu0 0.0
        %479 = vmatprep.subr.mxu0 0.0
        %480 = vmatpush1.msra.mxu0 0.0
        %481 = vmatprep.subr.mxu0 0.0
        %482 = vmatpush1.msra.mxu0 0.0
        %483 = vmatprep.subr.mxu0 0.0
        %484 = vmatpush1.msra.mxu0 0.0
        %485 = vmatprep.mubr.f32.mxu0 0.0
        %486 = vmatmul.mubr.f32.gmra.mrb[0].mxu0 %v416
        %v487 = vpop.f32.mrb[0].mxu0
        %v488 = vadd.f32 0.0, %v487
        %v489 = vpop.f32.mrb[0].mxu0
        %490 = vdwg.mxu0
        %v491 = vadd.f32 %v408, %v488
        %s492 = scalar_lea.vmem %s218, 12 [#allocation2]
        %v493 = vld [vmem:[%s492] sm:$0xf]
        %s494 = scalar_lea.vmem [#allocation5], 12
        %v495 = vld [vmem:[%s494] sm:$0xf]
        %v497 = vsel %vm257, %v493, 0
        %v500 = vsel %vm261, %v495, 0
        %502 = vmatprep.subr.mxu0 0.0
        %503 = vmatpush1.msra.mxu0 %v500
        %504 = vmatprep.subr.mxu0 0.0
        %505 = vmatpush1.msra.mxu0 0.0
        %506 = vmatprep.subr.mxu0 0.0
        %507 = vmatpush1.msra.mxu0 0.0
        %508 = vmatprep.subr.mxu0 0.0
        %509 = vmatpush1.msra.mxu0 0.0
        %510 = vmatprep.subr.mxu0 0.0
        %511 = vmatpush1.msra.mxu0 0.0
        %512 = vmatprep.subr.mxu0 0.0
        %513 = vmatpush1.msra.mxu0 0.0
        %514 = vmatprep.subr.mxu0 0.0
        %515 = vmatpush1.msra.mxu0 0.0
        %516 = vmatprep.subr.mxu0 0.0
        %517 = vmatpush1.msra.mxu0 0.0
        %518 = vmatprep.subr.mxu0 0.0
        %519 = vmatpush1.msra.mxu0 0.0
        %520 = vmatprep.subr.mxu0 0.0
        %521 = vmatpush1.msra.mxu0 0.0
        %522 = vmatprep.subr.mxu0 0.0
        %523 = vmatpush1.msra.mxu0 0.0
        %524 = vmatprep.subr.mxu0 0.0
        %525 = vmatpush1.msra.mxu0 0.0
        %526 = vmatprep.subr.mxu0 0.0
        %527 = vmatpush1.msra.mxu0 0.0
        %528 = vmatprep.subr.mxu0 0.0
        %529 = vmatpush1.msra.mxu0 0.0
        %530 = vmatprep.subr.mxu0 0.0
        %531 = vmatpush1.msra.mxu0 0.0
        %532 = vmatprep.subr.mxu0 0.0
        %533 = vmatpush1.msra.mxu0 0.0
        %534 = vmatprep.subr.mxu0 0.0
        %535 = vmatpush1.msra.mxu0 0.0
        %536 = vmatprep.subr.mxu0 0.0
        %537 = vmatpush1.msra.mxu0 0.0
        %538 = vmatprep.subr.mxu0 0.0
        %539 = vmatpush1.msra.mxu0 0.0
        %540 = vmatprep.subr.mxu0 0.0
        %541 = vmatpush1.msra.mxu0 0.0
        %542 = vmatprep.subr.mxu0 0.0
        %543 = vmatpush1.msra.mxu0 0.0
        %544 = vmatprep.subr.mxu0 0.0
        %545 = vmatpush1.msra.mxu0 0.0
        %546 = vmatprep.subr.mxu0 0.0
        %547 = vmatpush1.msra.mxu0 0.0
        %548 = vmatprep.subr.mxu0 0.0
        %549 = vmatpush1.msra.mxu0 0.0
        %550 = vmatprep.subr.mxu0 0.0
        %551 = vmatpush1.msra.mxu0 0.0
        %552 = vmatprep.subr.mxu0 0.0
        %553 = vmatpush1.msra.mxu0 0.0
        %554 = vmatprep.subr.mxu0 0.0
        %555 = vmatpush1.msra.mxu0 0.0
        %556 = vmatprep.subr.mxu0 0.0
        %557 = vmatpush1.msra.mxu0 0.0
        %558 = vmatprep.subr.mxu0 0.0
        %559 = vmatpush1.msra.mxu0 0.0
        %560 = vmatprep.subr.mxu0 0.0
        %561 = vmatpush1.msra.mxu0 0.0
        %562 = vmatprep.subr.mxu0 0.0
        %563 = vmatpush1.msra.mxu0 0.0
        %564 = vmatprep.subr.mxu0 0.0
        %565 = vmatpush1.msra.mxu0 0.0
        %566 = vmatprep.mubr.f32.mxu0 0.0
        %567 = vmatmul.mubr.f32.gmra.mrb[0].mxu0 %v497
        %v568 = vpop.f32.mrb[0].mxu0
        %v569 = vadd.f32 0.0, %v568
        %v570 = vpop.f32.mrb[0].mxu0
        %571 = vdwg.mxu0
        %v572 = vadd.f32 %v491, %v569
        %v573 = vld [vmem:[%s250] sm:$0x1]
        %v575 = vlaneseq
        %v576 = vshrl.u32 %v575, 7
        %v577 = vsub.s32 0, %v576
        %v578 = vrot.slane %v573, %v577
        %v580 = vadd.f32 %v572, %v578
        %581 = vst [vmem:[%s247] sm:$0xf] %v580
        %s582 = sand.u32 %s132, 1
        %s583 = scalar_lea.sflag [#allocation4], %s582
        %s584 = sand.u32 %s132, 1
        %s585 = smul.addr %s584, 4
        %s586 = scalar_lea.vmem [#allocation7], %s585
        // Predicated region
        $region41: #{tpu_custom_call.1} parent=31 // pred_check
          %p587 = pneg %p142
        $region42: #{tpu_custom_call.1} parent=31 // pred_check_branch
          %589 = sbr.rel (%p587) target = $region44
        $region43: #{tpu_custom_call.1} parent=31 // pred_region
          %s591 = ssub.s32 64, 64
          %592 = vsyncadd %s583, %s591
          %s593 = sadd.s32 %s28, %s27
          %s594 = sadd.s32 %s593, %s26
          %s595 = smul.addr %s594, 64
          %s596 = scalar_lea.hbm %s3, %s595
          %s598 = sshll.u32 %s586, 4
          %s599 = int_to_ptr.vmem [resolvable:$true] %s598
          %601 = dma.vmem_to_hbm [thread:$0]  %s599, 64, %s596, %s583
        $region44: #{tpu_custom_call.1} parent=31 // pred_fallthru
          _
      $region32: #{tpu_custom_call.1} parent=5 // pred_fallthru
        _
      %p602 = scmp.le.s32.totalorder 2, %s16
      // Predicated region
      $region45: #{tpu_custom_call.1} parent=5 // pred_check
        %p603 = pneg %p602
      $region46: #{tpu_custom_call.1} parent=5 // pred_check_branch
        %605 = sbr.rel (%p603) target = $region48
      $region47: #{tpu_custom_call.1} parent=5 // pred_region
        %s606 = ssub.s32 %s16, 2
        // Predicated region
        $region49: #{tpu_custom_call.1} parent=47 // pred_check
          %p607 = pneg %p148
        $region50: #{tpu_custom_call.1} parent=47 // pred_check_branch
          %609 = sbr.rel (%p607) target = $region52
        $region51: #{tpu_custom_call.1} parent=47 // pred_region
          %s610 = sand.u32 %s133, 1
          %s611 = scalar_lea.sflag [#allocation4], %s610
          %s612 = sand.u32 %s133, 1
          %s613 = smul.addr %s612, 4
          %s614 = scalar_lea.vmem [#allocation7], %s613
          %615 = dma.done %s611, 64
        $region52: #{tpu_custom_call.1} parent=47 // pred_fallthru
          _
      $region48: #{tpu_custom_call.1} parent=5 // pred_fallthru
        _
    $region6: #{tpu_custom_call.1} parent=1 // loop_footer
      %s20 = sadd.s32 1, %s16
    $region7: #{tpu_custom_call.1} parent=1 // loop_footer_branch
      %15 = sbr.rel target = $region3
    $region8: #{tpu_custom_call.1} parent=1 // loop_exit
      _
    %616 = vsyncpa [#allocation3], 1
    %s617 = scalar_lea.sflag [#allocation3], 1
    %618 = vsyncpa %s617, 1
    %619 = vsyncpa [#allocation6], 1
    %620 = vsyncpa [#allocation4], 1
    %s621 = scalar_lea.sflag [#allocation4], 1
    %622 = vsyncpa %s621, 1

</llo_original>
